<compile_context>
chip_gen: v7x
topology: tpu7x:2x2x1
jax: 0.10.0
libtpu: 0.0.40
codegen_flags: <defaults>
</compile_context>

<pallas_src>
import functools
import itertools

import numpy as np

import jax
import jax.numpy as jnp
from jax.experimental import pallas as pl
from jax.experimental.pallas import tpu as pltpu


def _round_up(x, m):
    return (x + m - 1) // m * m


def _gate_matrix_kernel(u_ref, nc_ref, onehot_ref, local_ref, o_ref, *,
                        n_total, n_modules, rounds):
    """One batch tile of the joint nested-gate matrix, computed from u alone.

    u_ref:      [bt, 1]   f32  per-sample control (keep fraction)
    nc_ref:     [1,  Mp]  f32  ncomponents[j] (0 in the padded tail)
    onehot_ref: [Mp, Np]  f32  module -> column one-hot map
    local_ref:  [1,  Np]  f32  column index local to its module
    o_ref:      [bt, Np]  out  gate-matrix tile (0/1)

    The reverse round-robin `allocate` while-loop of the original is replaced
    by its closed form.  With capf[j] = ncomponents[j]*u (float cap), the loop
    hands out one unit per still-eligible module per round, last module first,
    until c = min(floor(u*(N+1)), N) units are placed.  Therefore, with
    cap[j] = ceil(capf[j]):
        f(t)  = sum_j min(t, cap[j])         units placed after t full rounds
        T     = max{t : f(t) <= c}           number of complete rounds
        rem   = c - f(T)                     units placed in the partial round
        cs[j] = min(T, cap[j])
                + [capf[j] > T] * [#{j' > j : capf[j'] > T} < rem]
    and gate[b, col] = 1 iff local(col) < cs[b, module(col)].
    """
    u = u_ref[...]                                      # [bt, 1]
    capf = u * nc_ref[...]                              # [bt, Mp] float caps
    cap = jnp.ceil(capf)                                # integer caps (as f32)
    c = jnp.minimum(jnp.floor(u * (n_total + 1.0)), float(n_total))   # [bt, 1]

    # T = number of complete rounds.  rounds == max(ncomponents): small for
    # blockdrop-style configs, so unroll at trace time (scheduler visibility).
    T = jnp.zeros_like(c)
    for t in range(1, rounds + 1):
        f_t = jnp.sum(jnp.minimum(float(t), cap), axis=1, keepdims=True)
        T = T + (f_t <= c).astype(jnp.float32)
    rem = c - jnp.sum(jnp.minimum(T, cap), axis=1, keepdims=True)       # [bt, 1]

    # Partial round: modules still below their cap get one extra unit, last
    # module first, while `rem` lasts.  Padded modules have capf == 0 so they
    # are never eligible and contribute nothing.
    elig = (capf > T).astype(jnp.float32)               # [bt, Mp]
    col = jax.lax.broadcasted_iota(jnp.int32, nc_ref.shape, 1)          # [1, Mp]
    rank = jnp.zeros_like(capf)                         # #{j' > j : eligible}
    for jp in range(1, n_modules):
        rank = rank + elig[:, jp:jp + 1] * (col < jp).astype(jnp.float32)
    cs = jnp.minimum(T, cap) + elig * (rank < rem).astype(jnp.float32)  # [bt, Mp]

    # thresh[b, col] = cs[b, module_of(col)].  Unrolled broadcast-FMA for tiny
    # M (avoids a degenerate MXU op); for larger M one matmul whose contracting
    # dim is padded to 128, so it is a clean MXU shape.
    if n_modules > 4:
        thresh = jnp.dot(cs, onehot_ref[...], preferred_element_type=jnp.float32)
    else:
        thresh = cs[:, 0:1] * onehot_ref[0:1, :]
        for j in range(1, n_modules):
            thresh = thresh + cs[:, j:j + 1] * onehot_ref[j:j + 1, :]

    # Nested (prefix) gate; padded columns have thresh == 0 and stay 0.
    # 0/1 values are exact in any output dtype (f32/bf16/int8).
    o_ref[...] = (local_ref[...] < thresh).astype(o_ref.dtype)


@functools.partial(jax.jit,
                   static_argnames=("n_total", "n_modules", "rounds", "out_dtype"))
def _joint_gate_matrix(u, nc_row, onehot, local_idx, *,
                       n_total, n_modules, rounds, out_dtype):
    """u [B] f32 -> joint nested-gate matrix [B, N_pad] in one pallas_call."""
    B = u.shape[0]
    M_pad, N_pad = onehot.shape
    itemsize = jnp.dtype(out_dtype).itemsize
    sub = max(8, 32 // itemsize)            # sublane multiple: f32 8, bf16 16, i8 32

    # --- batch tiling --------------------------------------------------------
    B8 = _round_up(B, sub)
    ntiles = pl.cdiv(B8, 1024)              # cap tile at 1024 rows (HBM-bound op)
    if ntiles == 1 and B8 > sub:
        ntiles = 2                          # >=2 grid steps -> both v7x TCs busy
    b_tile = _round_up(pl.cdiv(B8, ntiles), sub)

    # --- VMEM budget (v7x: 64 MiB physical / 32 MiB scoped default) ----------
    def _vmem_bytes(bt):
        stream = 2 * bt * (N_pad * itemsize + 4)        # out + u, double-buffered
        consts = 2 * (M_pad * N_pad + N_pad + M_pad) * 4
        return stream + consts

    budget = 24 * 1024 * 1024
    while b_tile > sub and _vmem_bytes(b_tile) > budget:
        b_tile = _round_up(pl.cdiv(b_tile, 2), sub)
    B_pad = _round_up(B8, b_tile)
    vmem_limit = int(min(48 * 1024 * 1024,
                         max(32 * 1024 * 1024, 2 * _vmem_bytes(b_tile))))

    u2 = u.astype(jnp.float32).reshape(B, 1)
    if B_pad != B:
        u2 = jnp.pad(u2, ((0, B_pad - B), (0, 0)))      # pad rows -> all-zero gates

    kernel = functools.partial(_gate_matrix_kernel, n_total=n_total,
                               n_modules=n_modules, rounds=rounds)
    out = pl.pallas_call(
        kernel,
        out_shape=jax.ShapeDtypeStruct((B_pad, N_pad), out_dtype),
        grid=(B_pad // b_tile,),
        in_specs=[
            pl.BlockSpec((b_tile, 1), lambda i: (i, 0)),      # u (batch-tiled)
            pl.BlockSpec((1, M_pad), lambda i: (0, 0)),       # ncomponents row
            pl.BlockSpec((M_pad, N_pad), lambda i: (0, 0)),   # module one-hot
            pl.BlockSpec((1, N_pad), lambda i: (0, 0)),       # local column idx
        ],
        out_specs=pl.BlockSpec((b_tile, N_pad), lambda i: (i, 0)),
        compiler_params=pltpu.CompilerParams(
            dimension_semantics=("parallel",),
            vmem_limit_bytes=vmem_limit),
    )(u2, nc_row, onehot, local_idx)
    # Keep the lane-dense N_pad columns; forward() only ever column-slices
    # within the first N columns, so the padding is never touched downstream.
    return out[:B]


class BlockdropNestedGate:
    """JAX/Pallas port of nnsearch BlockdropNestedGate (forward pass only).

    reset() builds the joint nested-gate matrix with a single fused Pallas
    call; forward() returns per-module column slices of the cached matrix.
    """

    def __init__(self, ncomponents, gate_dtype=jnp.float32):
        self.ncomponents = [int(n) for n in ncomponents]
        self.boundaries = [0] + list(itertools.accumulate(self.ncomponents))
        self._minval = 0
        self._maxval = sum(self.ncomponents)                # N
        self._rounds = max(1, max(self.ncomponents))
        self._gate_dtype = gate_dtype                       # f32 matches .float()
        M = len(self.ncomponents)
        N = self._maxval
        # Static kernel constants, padded lane-dense (N -> 128k) and with the
        # module axis padded to 128 so the M>4 path is a clean MXU matmul.
        N_pad = _round_up(max(N, 1), 128)
        M_pad = _round_up(max(M, 1), 128)
        onehot = np.zeros((M_pad, N_pad), dtype=np.float32)
        local = np.zeros((1, N_pad), dtype=np.float32)
        nc_row = np.zeros((1, M_pad), dtype=np.float32)
        for j, nj in enumerate(self.ncomponents):
            s = self.boundaries[j]
            onehot[j, s:s + nj] = 1.0
            local[0, s:s + nj] = np.arange(nj, dtype=np.float32)
            nc_row[0, j] = float(nj)
        self._onehot = jnp.asarray(onehot)
        self._local = jnp.asarray(local)
        self._ncrow = jnp.asarray(nc_row)
        self._u = None
        self._gcache = None
        self._i = -1

    # --- GatePolicy interface -------------------------------------------------
    def set_control(self, u):
        self._u = jnp.asarray(u, dtype=jnp.float32).reshape(-1)

    def next_module(self, m=None):
        self._i += 1

    def reset(self, x):
        del x  # gate depends only on the control signal u, as in the original
        # TODO(synk): relax.gate_matrix_from_count is a custom autograd Function;
        # only its forward (prefix mask) is reproduced here.
        gs = _joint_gate_matrix(
            self._u, self._ncrow, self._onehot, self._local,
            n_total=self._maxval, n_modules=len(self.ncomponents),
            rounds=self._rounds, out_dtype=self._gate_dtype)
        self._gcache = (gs, None)
        self._i = -1

    def forward(self, x):
        i, j = self.boundaries[self._i], self.boundaries[self._i + 1]
        ys = [y[:, i:j] if y is not None else None for y in self._gcache]
        return tuple(ys)

    def joint_gate_matrix(self):
        """The [B, N] joint gate matrix (drops the lane padding)."""
        return self._gcache[0][:, :self._maxval]


def _reference_joint(u, ncomponents):
    """NumPy reference mirroring the PyTorch reset() math (float32, like torch)."""
    u = np.asarray(u, dtype=np.float32).reshape(-1)
    nc = [int(n) for n in ncomponents]
    N, M, B = sum(nc), len(nc), u.shape[0]
    c = np.minimum(np.floor(u * np.float32(N + 1)), np.float32(N))
    cs = np.zeros((B, M), dtype=np.int64)
    for i in range(B):
        n = float(c[i])
        caps = [np.float32(nc[j]) * u[i] for j in range(M)]
        gi = [0] * M
        s = 0
        for _ in range(N + M + 2):          # bounded stand-in for `while True`
            if s == n:
                break
            for j in reversed(range(M)):
                if s == n:
                    break
                if gi[j] < caps[j]:
                    gi[j] += 1
                    s += 1
        cs[i] = gi
    cols = [(np.arange(nj)[None, :] < cs[:, j:j + 1]).astype(np.float32)
            for j, nj in enumerate(nc)]
    return np.concatenate(cols, axis=1), c


if __name__ == "__main__":
    key = jax.random.PRNGKey(0)
    kx, ku = jax.random.split(key)

    # --- Test 1: demo-sized config matching the PyTorch module usage ---------
    B, C, H, W = 2, 4, 16, 16
    ncomponents = [2, 4, 6]                  # 3 gated modules, 12 components
    x = jax.random.normal(kx, (B, C, H, W), dtype=jnp.float32)
    u = jnp.array([0.25, 0.75], dtype=jnp.float32)   # per-sample keep fraction

    gate = BlockdropNestedGate(ncomponents)  # float32 gates (original .float())
    gate.set_control(u)
    gate.reset(x)

    slices = []
    for _ in range(len(ncomponents)):
        gate.next_module(None)
        g, info = gate.forward(x)
        assert info is None
        slices.append(g)
    jax.block_until_ready(slices)

    ref_joint, ref_c = _reference_joint(np.asarray(u), ncomponents)
    joint = np.asarray(gate.joint_gate_matrix())
    assert joint.shape == (B, sum(ncomponents))
    np.testing.assert_allclose(joint, ref_joint)
    bnd = gate.boundaries
    for j, nj in enumerate(ncomponents):
        got = np.asarray(slices[j])
        assert got.shape == (B, nj)
        np.testing.assert_allclose(got, ref_joint[:, bnd[j]:bnd[j + 1]])
    # Total active components per sample equals ProportionToCount(u).
    np.testing.assert_allclose(joint.sum(axis=1), ref_c)

    # --- Test 2: larger batch, M > 4 (MXU path), >=2 grid steps, bf16 gates --
    B2 = 48
    nc2 = [1, 2, 3, 4, 5, 6]                 # 6 modules, 21 components
    u2 = jax.random.uniform(ku, (B2,), dtype=jnp.float32)
    gate2 = BlockdropNestedGate(nc2, gate_dtype=jnp.bfloat16)
    gate2.set_control(u2)
    gate2.reset(None)
    jax.block_until_ready(gate2._gcache[0])
    joint2 = np.asarray(gate2.joint_gate_matrix()).astype(np.float32)
    ref2, _ = _reference_joint(np.asarray(u2), nc2)
    np.testing.assert_allclose(joint2, ref2)

    print("KERNEL_OK")
</pallas_src>

<mosaic_0001>
module attributes {stable_mosaic.version = 11 : i64} {
  func.func @_gate_matrix_kernel(%arg0: i32, %arg1: memref<8x1xf32, #tpu.memory_space<vmem>>, %arg2: memref<1x128xf32, #tpu.memory_space<vmem>>, %arg3: memref<128x128xf32, #tpu.memory_space<vmem>>, %arg4: memref<1x128xf32, #tpu.memory_space<vmem>>, %arg5: memref<8x128xf32, #tpu.memory_space<vmem>>) attributes {dimension_semantics = [#tpu.dimension_semantics<parallel>], iteration_bounds = array<i64: 1>, scalar_prefetch = 0 : i64, scratch_operands = 0 : i64, tpu.core_type = #tpu.core_type<tc>, window_params = [{transform_indices = @transform_0, window_bounds = array<i64: 8, 1>}, {pipeline_mode = #tpu.pipeline_mode<synchronous>, transform_indices = @transform_1, window_bounds = array<i64: 1, 128>}, {pipeline_mode = #tpu.pipeline_mode<synchronous>, transform_indices = @transform_2, window_bounds = array<i64: 128, 128>}, {pipeline_mode = #tpu.pipeline_mode<synchronous>, transform_indices = @transform_3, window_bounds = array<i64: 1, 128>}, {transform_indices = @transform_4, window_bounds = array<i64: 8, 128>}]} {
    %c0 = arith.constant 0 : index
    %c0_0 = arith.constant 0 : index
    %0 = vector.load %arg1[%c0, %c0_0] : memref<8x1xf32, #tpu.memory_space<vmem>>, vector<8x1xf32>
    %c0_1 = arith.constant 0 : index
    %c0_2 = arith.constant 0 : index
    %1 = vector.load %arg2[%c0_1, %c0_2] : memref<1x128xf32, #tpu.memory_space<vmem>>, vector<1x128xf32>
    %2 = vector.broadcast %0 : vector<8x1xf32> to vector<8x128xf32>
    %3 = vector.broadcast %1 : vector<1x128xf32> to vector<8x128xf32>
    %4 = arith.mulf %2, %3 : vector<8x128xf32>
    %5 = math.ceil %4 : vector<8x128xf32>
    %cst = arith.constant 1.300000e+01 : f32
    %6 = vector.broadcast %cst : f32 to vector<8x1xf32>
    %7 = arith.mulf %0, %6 : vector<8x1xf32>
    %8 = math.floor %7 : vector<8x1xf32>
    %cst_3 = arith.constant 1.200000e+01 : f32
    %9 = vector.broadcast %cst_3 : f32 to vector<8x1xf32>
    %10 = arith.minimumf %8, %9 : vector<8x1xf32>
    %cst_4 = arith.constant 0.000000e+00 : f32
    %11 = vector.broadcast %cst_4 : f32 to vector<8x1xf32>
    %cst_5 = arith.constant 1.000000e+00 : f32
    %12 = vector.broadcast %cst_5 : f32 to vector<8x128xf32>
    %13 = arith.minimumf %12, %5 : vector<8x128xf32>
    %cst_6 = arith.constant dense<0.000000e+00> : vector<8xf32>
    %14 = vector.multi_reduction <add>, %13, %cst_6 [1] : vector<8x128xf32> to vector<8xf32>
    %15 = vector.shape_cast %14 : vector<8xf32> to vector<8x1xf32>
    %16 = arith.cmpf ole, %15, %10 : vector<8x1xf32>
    %17 = arith.extui %16 : vector<8x1xi1> to vector<8x1xi32>
    %18 = arith.sitofp %17 : vector<8x1xi32> to vector<8x1xf32>
    %19 = arith.addf %11, %18 : vector<8x1xf32>
    %cst_7 = arith.constant 2.000000e+00 : f32
    %20 = vector.broadcast %cst_7 : f32 to vector<8x128xf32>
    %21 = arith.minimumf %20, %5 : vector<8x128xf32>
    %cst_8 = arith.constant dense<0.000000e+00> : vector<8xf32>
    %22 = vector.multi_reduction <add>, %21, %cst_8 [1] : vector<8x128xf32> to vector<8xf32>
    %23 = vector.shape_cast %22 : vector<8xf32> to vector<8x1xf32>
    %24 = arith.cmpf ole, %23, %10 : vector<8x1xf32>
    %25 = arith.extui %24 : vector<8x1xi1> to vector<8x1xi32>
    %26 = arith.sitofp %25 : vector<8x1xi32> to vector<8x1xf32>
    %27 = arith.addf %19, %26 : vector<8x1xf32>
    %cst_9 = arith.constant 3.000000e+00 : f32
    %28 = vector.broadcast %cst_9 : f32 to vector<8x128xf32>
    %29 = arith.minimumf %28, %5 : vector<8x128xf32>
    %cst_10 = arith.constant dense<0.000000e+00> : vector<8xf32>
    %30 = vector.multi_reduction <add>, %29, %cst_10 [1] : vector<8x128xf32> to vector<8xf32>
    %31 = vector.shape_cast %30 : vector<8xf32> to vector<8x1xf32>
    %32 = arith.cmpf ole, %31, %10 : vector<8x1xf32>
    %33 = arith.extui %32 : vector<8x1xi1> to vector<8x1xi32>
    %34 = arith.sitofp %33 : vector<8x1xi32> to vector<8x1xf32>
    %35 = arith.addf %27, %34 : vector<8x1xf32>
    %cst_11 = arith.constant 4.000000e+00 : f32
    %36 = vector.broadcast %cst_11 : f32 to vector<8x128xf32>
    %37 = arith.minimumf %36, %5 : vector<8x128xf32>
    %cst_12 = arith.constant dense<0.000000e+00> : vector<8xf32>
    %38 = vector.multi_reduction <add>, %37, %cst_12 [1] : vector<8x128xf32> to vector<8xf32>
    %39 = vector.shape_cast %38 : vector<8xf32> to vector<8x1xf32>
    %40 = arith.cmpf ole, %39, %10 : vector<8x1xf32>
    %41 = arith.extui %40 : vector<8x1xi1> to vector<8x1xi32>
    %42 = arith.sitofp %41 : vector<8x1xi32> to vector<8x1xf32>
    %43 = arith.addf %35, %42 : vector<8x1xf32>
    %cst_13 = arith.constant 5.000000e+00 : f32
    %44 = vector.broadcast %cst_13 : f32 to vector<8x128xf32>
    %45 = arith.minimumf %44, %5 : vector<8x128xf32>
    %cst_14 = arith.constant dense<0.000000e+00> : vector<8xf32>
    %46 = vector.multi_reduction <add>, %45, %cst_14 [1] : vector<8x128xf32> to vector<8xf32>
    %47 = vector.shape_cast %46 : vector<8xf32> to vector<8x1xf32>
    %48 = arith.cmpf ole, %47, %10 : vector<8x1xf32>
    %49 = arith.extui %48 : vector<8x1xi1> to vector<8x1xi32>
    %50 = arith.sitofp %49 : vector<8x1xi32> to vector<8x1xf32>
    %51 = arith.addf %43, %50 : vector<8x1xf32>
    %cst_15 = arith.constant 6.000000e+00 : f32
    %52 = vector.broadcast %cst_15 : f32 to vector<8x128xf32>
    %53 = arith.minimumf %52, %5 : vector<8x128xf32>
    %cst_16 = arith.constant dense<0.000000e+00> : vector<8xf32>
    %54 = vector.multi_reduction <add>, %53, %cst_16 [1] : vector<8x128xf32> to vector<8xf32>
    %55 = vector.shape_cast %54 : vector<8xf32> to vector<8x1xf32>
    %56 = arith.cmpf ole, %55, %10 : vector<8x1xf32>
    %57 = arith.extui %56 : vector<8x1xi1> to vector<8x1xi32>
    %58 = arith.sitofp %57 : vector<8x1xi32> to vector<8x1xf32>
    %59 = arith.addf %51, %58 : vector<8x1xf32>
    %60 = vector.broadcast %59 : vector<8x1xf32> to vector<8x128xf32>
    %61 = arith.minimumf %60, %5 : vector<8x128xf32>
    %cst_17 = arith.constant dense<0.000000e+00> : vector<8xf32>
    %62 = vector.multi_reduction <add>, %61, %cst_17 [1] : vector<8x128xf32> to vector<8xf32>
    %63 = vector.shape_cast %62 : vector<8xf32> to vector<8x1xf32>
    %64 = arith.subf %10, %63 : vector<8x1xf32>
    %65 = vector.broadcast %59 : vector<8x1xf32> to vector<8x128xf32>
    %66 = arith.cmpf ogt, %4, %65 : vector<8x128xf32>
    %67 = arith.extui %66 : vector<8x128xi1> to vector<8x128xi32>
    %68 = arith.sitofp %67 : vector<8x128xi32> to vector<8x128xf32>
    %69 = tpu.iota {dimensions = array<i32: 1>} : vector<1x128xi32>
    %cst_18 = arith.constant 0.000000e+00 : f32
    %70 = vector.broadcast %cst_18 : f32 to vector<8x128xf32>
    %71 = vector.extract_strided_slice %68 {offsets = [0, 1], sizes = [8, 1], strides = [1, 1]} : vector<8x128xf32> to vector<8x1xf32>
    %c1_i32 = arith.constant 1 : i32
    %72 = vector.broadcast %c1_i32 : i32 to vector<1x128xi32>
    %73 = arith.cmpi slt, %69, %72 : vector<1x128xi32>
    %74 = arith.extui %73 : vector<1x128xi1> to vector<1x128xi32>
    %75 = arith.sitofp %74 : vector<1x128xi32> to vector<1x128xf32>
    %76 = vector.broadcast %71 : vector<8x1xf32> to vector<8x128xf32>
    %77 = vector.broadcast %75 : vector<1x128xf32> to vector<8x128xf32>
    %78 = arith.mulf %76, %77 : vector<8x128xf32>
    %79 = arith.addf %70, %78 : vector<8x128xf32>
    %80 = vector.extract_strided_slice %68 {offsets = [0, 2], sizes = [8, 1], strides = [1, 1]} : vector<8x128xf32> to vector<8x1xf32>
    %c2_i32 = arith.constant 2 : i32
    %81 = vector.broadcast %c2_i32 : i32 to vector<1x128xi32>
    %82 = arith.cmpi slt, %69, %81 : vector<1x128xi32>
    %83 = arith.extui %82 : vector<1x128xi1> to vector<1x128xi32>
    %84 = arith.sitofp %83 : vector<1x128xi32> to vector<1x128xf32>
    %85 = vector.broadcast %80 : vector<8x1xf32> to vector<8x128xf32>
    %86 = vector.broadcast %84 : vector<1x128xf32> to vector<8x128xf32>
    %87 = arith.mulf %85, %86 : vector<8x128xf32>
    %88 = arith.addf %79, %87 : vector<8x128xf32>
    %89 = vector.broadcast %59 : vector<8x1xf32> to vector<8x128xf32>
    %90 = arith.minimumf %89, %5 : vector<8x128xf32>
    %91 = vector.broadcast %64 : vector<8x1xf32> to vector<8x128xf32>
    %92 = arith.cmpf olt, %88, %91 : vector<8x128xf32>
    %93 = arith.extui %92 : vector<8x128xi1> to vector<8x128xi32>
    %94 = arith.sitofp %93 : vector<8x128xi32> to vector<8x128xf32>
    %95 = arith.mulf %68, %94 : vector<8x128xf32>
    %96 = arith.addf %90, %95 : vector<8x128xf32>
    %97 = vector.extract_strided_slice %96 {offsets = [0, 0], sizes = [8, 1], strides = [1, 1]} : vector<8x128xf32> to vector<8x1xf32>
    %c0_19 = arith.constant 0 : index
    %c0_20 = arith.constant 0 : index
    %98 = vector.load %arg3[%c0_19, %c0_20] : memref<128x128xf32, #tpu.memory_space<vmem>>, vector<1x128xf32>
    %99 = vector.broadcast %97 : vector<8x1xf32> to vector<8x128xf32>
    %100 = vector.broadcast %98 : vector<1x128xf32> to vector<8x128xf32>
    %101 = arith.mulf %99, %100 : vector<8x128xf32>
    %102 = vector.extract_strided_slice %96 {offsets = [0, 1], sizes = [8, 1], strides = [1, 1]} : vector<8x128xf32> to vector<8x1xf32>
    %c1 = arith.constant 1 : index
    %c0_21 = arith.constant 0 : index
    %103 = vector.load %arg3[%c1, %c0_21] : memref<128x128xf32, #tpu.memory_space<vmem>>, vector<1x128xf32>
    %104 = vector.broadcast %102 : vector<8x1xf32> to vector<8x128xf32>
    %105 = vector.broadcast %103 : vector<1x128xf32> to vector<8x128xf32>
    %106 = arith.mulf %104, %105 : vector<8x128xf32>
    %107 = arith.addf %101, %106 : vector<8x128xf32>
    %108 = vector.extract_strided_slice %96 {offsets = [0, 2], sizes = [8, 1], strides = [1, 1]} : vector<8x128xf32> to vector<8x1xf32>
    %c2 = arith.constant 2 : index
    %c0_22 = arith.constant 0 : index
    %109 = vector.load %arg3[%c2, %c0_22] : memref<128x128xf32, #tpu.memory_space<vmem>>, vector<1x128xf32>
    %110 = vector.broadcast %108 : vector<8x1xf32> to vector<8x128xf32>
    %111 = vector.broadcast %109 : vector<1x128xf32> to vector<8x128xf32>
    %112 = arith.mulf %110, %111 : vector<8x128xf32>
    %113 = arith.addf %107, %112 : vector<8x128xf32>
    %c0_23 = arith.constant 0 : index
    %c0_24 = arith.constant 0 : index
    %114 = vector.load %arg4[%c0_23, %c0_24] : memref<1x128xf32, #tpu.memory_space<vmem>>, vector<1x128xf32>
    %115 = vector.broadcast %114 : vector<1x128xf32> to vector<8x128xf32>
    %116 = arith.cmpf olt, %115, %113 : vector<8x128xf32>
    %117 = arith.extui %116 : vector<8x128xi1> to vector<8x128xi32>
    %118 = arith.sitofp %117 : vector<8x128xi32> to vector<8x128xf32>
    %c0_25 = arith.constant 0 : index
    %c0_26 = arith.constant 0 : index
    %119 = vector.load %arg5[%c0_25, %c0_26] : memref<8x128xf32, #tpu.memory_space<vmem>>, vector<8x128xf32>
    tpu.vector_store %arg5[%c0_25, %c0_26], %118 {strides = array<i32>} : memref<8x128xf32, #tpu.memory_space<vmem>>, vector<8x128xf32>,
    return
  }
  func.func @transform_0(%arg0: i32) -> (i32, i32) {
    %c0_i32 = arith.constant 0 : i32
    %c0_i32_0 = arith.constant 0 : i32
    return %arg0, %c0_i32 : i32, i32
  }
  func.func @transform_1(%arg0: i32) -> (i32, i32) {
    %c0_i32 = arith.constant 0 : i32
    %c0_i32_0 = arith.constant 0 : i32
    %c0_i32_1 = arith.constant 0 : i32
    return %c0_i32, %c0_i32_0 : i32, i32
  }
  func.func @transform_2(%arg0: i32) -> (i32, i32) {
    %c0_i32 = arith.constant 0 : i32
    %c0_i32_0 = arith.constant 0 : i32
    %c0_i32_1 = arith.constant 0 : i32
    return %c0_i32, %c0_i32_0 : i32, i32
  }
  func.func @transform_3(%arg0: i32) -> (i32, i32) {
    %c0_i32 = arith.constant 0 : i32
    %c0_i32_0 = arith.constant 0 : i32
    %c0_i32_1 = arith.constant 0 : i32
    return %c0_i32, %c0_i32_0 : i32, i32
  }
  func.func @transform_4(%arg0: i32) -> (i32, i32) {
    %c0_i32 = arith.constant 0 : i32
    %c0_i32_0 = arith.constant 0 : i32
    return %arg0, %c0_i32 : i32, i32
  }
}

</mosaic_0001>

<llo_original>
// kernel: _joint_gate_matrix.1
$region0: #{_joint_gate_matrix.1}
  #allocation0 [shape = 'u32[]', space=smem, size = 0x4, offset = 0x4, fixed_abs, tag = 'smem constant byte address 0x4 - core index']
  #allocation1 [shape = 'u32[144,128]{1,0:T(1,128)}', space=vmem, size = 0x12000, scoped, tag = 'internal scratch']
  %s0 = inlined_call_operand.vmem [shape: f32[8,1], index: 0, kind: input, shape index: {}]
  %s1 = inlined_call_operand.vmem [shape: f32[1,128], index: 1, kind: input, shape index: {}]
  %s2 = inlined_call_operand.hbm [shape: f32[128,128], index: 2, kind: input, shape index: {}]
  %s3 = inlined_call_operand.vmem [shape: f32[1,128], index: 3, kind: input, shape index: {}]
  %s4 = inlined_call_operand.vmem [shape: f32[8,128], index: 4, kind: output, shape index: {}]
  %s5 = sld [smem:[#allocation0]]
  $region30: #{_joint_gate_matrix.1} parent=0
    _
  %s7 = ssub.s32 1, %s5
  %s8 = scalar_select 0, %s7, %s5
  $region1: #{_joint_gate_matrix.1} parent=0
    #allocation2 [shape = 'u8[65536]{0}', space=vmem, size = 0x10000, scoped, tag = 'input window, operand 2, single buffered']
    #allocation3 [shape = 's32[1]{0}', space=sflag, size = 0x4, scoped, tag = 'scoped memory for _joint_gate_matrix.1']
    %9 = vsyncpa [#allocation3], 0
    // Predicated region
    $region2: #{_joint_gate_matrix.1} parent=1 // pred_check
      _
    $region3: #{_joint_gate_matrix.1} parent=1 // pred_check_branch
      %11 = sbr.rel (0) target = $region5
    $region4: #{_joint_gate_matrix.1} parent=1 // pred_region
      _
    $region5: #{_joint_gate_matrix.1} parent=1 // pred_fallthru
      _
    // Predicated region
    $region6: #{_joint_gate_matrix.1} parent=1 // pred_check
      _
    $region7: #{_joint_gate_matrix.1} parent=1 // pred_check_branch
      %13 = sbr.rel (0) target = $region9
    $region8: #{_joint_gate_matrix.1} parent=1 // pred_region
      _
    $region9: #{_joint_gate_matrix.1} parent=1 // pred_fallthru
      _
    // Predicated region
    $region10: #{_joint_gate_matrix.1} parent=1 // pred_check
      _
    $region11: #{_joint_gate_matrix.1} parent=1 // pred_check_branch
      %15 = sbr.rel (0) target = $region13
    $region12: #{_joint_gate_matrix.1} parent=1 // pred_region
      %s17 = ssub.s32 2048, 2048
      %18 = vsyncadd [#allocation3], %s17
      %s19 = sshll.u32 [#allocation2], 4
      %s20 = int_to_ptr.vmem [resolvable:$true] %s19
      %25 = dma.hbm_to_vmem [thread:$0]  %s2, 2048, %s20, [#allocation3], 128, 128, 8
    $region13: #{_joint_gate_matrix.1} parent=1 // pred_fallthru
      _
    // Predicated region
    $region14: #{_joint_gate_matrix.1} parent=1 // pred_check
      _
    $region15: #{_joint_gate_matrix.1} parent=1 // pred_check_branch
      %27 = sbr.rel (0) target = $region17
    $region16: #{_joint_gate_matrix.1} parent=1 // pred_region
      _
    $region17: #{_joint_gate_matrix.1} parent=1 // pred_fallthru
      _
    // Predicated region
    $region18: #{_joint_gate_matrix.1} parent=1 // pred_check
      _
    $region19: #{_joint_gate_matrix.1} parent=1 // pred_check_branch
      %29 = sbr.rel (0) target = $region21
    $region20: #{_joint_gate_matrix.1} parent=1 // pred_region
      %30 = dma.done [#allocation3], 2048
    $region21: #{_joint_gate_matrix.1} parent=1 // pred_fallthru
      _
    %v31 = vld [vmem:[%s0] sm:$0xff]
    %v32 = vld [vmem:[%s1] sm:$0x1]
    %34 = vset.pattern.permute.xlu0 0
    %35 = vperm.xlu0 %34, %v31
    %v36 = vpop.permute.xlu0 %35
    %v39 = vlaneseq
    %v40 = vshrl.u32 %v39, 7
    %v41 = vsub.s32 0, %v40
    %v42 = vrot.slane %v32, %v41
    %v44 = vmul.f32 %v36, %v42
    %v45 = vceil.f32 %v44
    %v46 = vmul.f32 %v31, 13.0
    %v47 = vfloor.f32 %v46
    %v48 = vmin.f32 %v47, 12.0
    %v49 = vmin.f32 %v45, 1.0
    %50 = vadd.xlane.f32.xlu0 %v49
    %v51 = vpop.xlane.xlu0 %50
    %vm52 = vcmp.le.f32.partialorder %v51, %v48
    %v53 = vsel %vm52, 1, 0
    %v54 = vcvt.s32.f32 %v53
    %v55 = vadd.f32 %v54, 0.0
    %v56 = vmin.f32 %v45, 2.0
    %57 = vadd.xlane.f32.xlu0 %v56
    %v58 = vpop.xlane.xlu0 %57
    %vm59 = vcmp.le.f32.partialorder %v58, %v48
    %v60 = vsel %vm59, 1, 0
    %v61 = vcvt.s32.f32 %v60
    %v62 = vadd.f32 %v55, %v61
    %v63 = vmin.f32 %v45, 3.0
    %64 = vadd.xlane.f32.xlu0 %v63
    %v65 = vpop.xlane.xlu0 %64
    %vm66 = vcmp.le.f32.partialorder %v65, %v48
    %v67 = vsel %vm66, 1, 0
    %v68 = vcvt.s32.f32 %v67
    %v69 = vadd.f32 %v62, %v68
    %v70 = vmin.f32 %v45, 4.0
    %71 = vadd.xlane.f32.xlu0 %v70
    %v72 = vpop.xlane.xlu0 %71
    %vm73 = vcmp.le.f32.partialorder %v72, %v48
    %v74 = vsel %vm73, 1, 0
    %v75 = vcvt.s32.f32 %v74
    %v76 = vadd.f32 %v69, %v75
    %v77 = vmin.f32 %v45, 5.0
    %78 = vadd.xlane.f32.xlu0 %v77
    %v79 = vpop.xlane.xlu0 %78
    %vm80 = vcmp.le.f32.partialorder %v79, %v48
    %v81 = vsel %vm80, 1, 0
    %v82 = vcvt.s32.f32 %v81
    %v83 = vadd.f32 %v76, %v82
    %v84 = vmin.f32 %v45, 6.0
    %85 = vadd.xlane.f32.xlu0 %v84
    %v86 = vpop.xlane.xlu0 %85
    %vm87 = vcmp.le.f32.partialorder %v86, %v48
    %v88 = vsel %vm87, 1, 0
    %v89 = vcvt.s32.f32 %v88
    %v90 = vadd.f32 %v83, %v89
    %92 = vset.pattern.permute.xlu0 0
    %93 = vperm.xlu0 %92, %v90
    %v94 = vpop.permute.xlu0 %93
    %v96 = vmin.f32 %v94, %v45
    %97 = vadd.xlane.f32.xlu0 %v96
    %v98 = vpop.xlane.xlu0 %97
    %v99 = vsub.f32 %v48, %v98
    %vm100 = vcmp.gt.f32.partialorder %v44, %v94
    %v101 = vsel %vm100, 1, 0
    %v102 = vcvt.s32.f32 %v101
    %v103 = vlaneseq
    %v104 = vand.u32 %v103, 127
    %vm105 = vcmp.lt.s32.totalorder %v104, 1
    %v106 = vsel %vm105, 1, 0
    %v107 = vcvt.s32.f32 %v106
    %109 = vset.pattern.permute.xlu0 1
    %110 = vperm.xlu0 %109, %v102
    %v111 = vpop.permute.xlu0 %110
    %v113 = vmul.f32 %v111, %v107
    %v114 = vadd.f32 %v113, 0.0
    %vm115 = vcmp.lt.s32.totalorder %v104, 2
    %v116 = vsel %vm115, 1, 0
    %v117 = vcvt.s32.f32 %v116
    %118 = vset.pattern.permute.xlu0 2
    %119 = vperm.xlu0 %118, %v102
    %v120 = vpop.permute.xlu0 %119
    %v122 = vmul.f32 %v120, %v117
    %v123 = vadd.f32 %v114, %v122
    %125 = vset.pattern.permute.xlu0 0
    %126 = vperm.xlu0 %125, %v99
    %v127 = vpop.permute.xlu0 %126
    %vm129 = vcmp.lt.f32.partialorder %v123, %v127
    %v130 = vsel %vm129, 1, 0
    %v131 = vcvt.s32.f32 %v130
    %v132 = vmul.f32 %v102, %v131
    %v133 = vadd.f32 %v96, %v132
    %v134 = vld [vmem:[#allocation2] sm:$0x1]
    %136 = vset.pattern.permute.xlu0 0
    %137 = vperm.xlu0 %136, %v133
    %v138 = vpop.permute.xlu0 %137
    %v140 = vlaneseq
    %v141 = vshrl.u32 %v140, 7
    %v142 = vsub.s32 0, %v141
    %v143 = vrot.slane %v134, %v142
    %v144 = vmul.f32 %v138, %v143
    %v145 = vld [vmem:[#allocation2 + $0x1] sm:$0x1]
    %146 = vset.pattern.permute.xlu0 1
    %147 = vperm.xlu0 %146, %v133
    %v148 = vpop.permute.xlu0 %147
    %v150 = vlaneseq
    %v151 = vshrl.u32 %v150, 7
    %v152 = vsub.s32 0, %v151
    %v153 = vrot.slane %v145, %v152
    %v154 = vmul.f32 %v148, %v153
    %v155 = vadd.f32 %v144, %v154
    %v156 = vld [vmem:[#allocation2 + $0x2] sm:$0x1]
    %157 = vset.pattern.permute.xlu0 2
    %158 = vperm.xlu0 %157, %v133
    %v159 = vpop.permute.xlu0 %158
    %v161 = vlaneseq
    %v162 = vshrl.u32 %v161, 7
    %v163 = vsub.s32 0, %v162
    %v164 = vrot.slane %v156, %v163
    %v165 = vmul.f32 %v159, %v164
    %v166 = vadd.f32 %v155, %v165
    %v167 = vld [vmem:[%s3] sm:$0x1]
    %v169 = vlaneseq
    %v170 = vshrl.u32 %v169, 7
    %v171 = vsub.s32 0, %v170
    %v172 = vrot.slane %v167, %v171
    %vm174 = vcmp.lt.f32.partialorder %v172, %v166
    %v175 = vsel %vm174, 1, 0
    %v176 = vcvt.s32.f32 %v175
    %177 = vst [vmem:[%s4] sm:$0xff] %v176
    // Predicated region
    $region22: #{_joint_gate_matrix.1} parent=1 // pred_check
      _
    $region23: #{_joint_gate_matrix.1} parent=1 // pred_check_branch
      %179 = sbr.rel (0) target = $region25
    $region24: #{_joint_gate_matrix.1} parent=1 // pred_region
      _
    $region25: #{_joint_gate_matrix.1} parent=1 // pred_fallthru
      _
    // Predicated region
    $region26: #{_joint_gate_matrix.1} parent=1 // pred_check
      _
    $region27: #{_joint_gate_matrix.1} parent=1 // pred_check_branch
      %181 = sbr.rel (0) target = $region29
    $region28: #{_joint_gate_matrix.1} parent=1 // pred_region
      _
    $region29: #{_joint_gate_matrix.1} parent=1 // pred_fallthru
      _
    %182 = vsyncpa [#allocation3], 1

</llo_original>
